<compile_context>
chip_gen: v7x
topology: tpu7x:2x2x1
jax: 0.10.0
libtpu: 0.0.40
codegen_flags: <defaults>
</compile_context>

<pallas_src>
import math

import jax
import jax.numpy as jnp
from jax import lax
from jax.experimental import pallas as pl
from jax.experimental.pallas import tpu as pltpu

_MASK_VALUE = -1e30  # finite "-inf": exp underflows to exactly 0, never NaN


def _pad_axis(x, axis, multiple):
    pad = (-x.shape[axis]) % multiple
    if pad == 0:
        return x
    widths = [(0, 0)] * x.ndim
    widths[axis] = (0, pad)
    return jnp.pad(x, widths)


# ---------------------------------------------------------------------------
# Generic tiled MXU matmul (fused QKV projection and output projection)
# ---------------------------------------------------------------------------
def _matmul_kernel(x_ref, w_ref, o_ref, acc_ref):
    @pl.when(pl.program_id(2) == 0)
    def _():
        acc_ref[...] = jnp.zeros_like(acc_ref)

    acc_ref[...] += jnp.dot(x_ref[...], w_ref[...],
                            preferred_element_type=jnp.float32)

    @pl.when(pl.program_id(2) == pl.num_programs(2) - 1)
    def _():
        o_ref[...] = acc_ref[...].astype(o_ref.dtype)


def pallas_matmul(x, w, *, tm=256, tn=256, tk=512, out_dtype=None):
    """x: [M, K], w: [K, N] -> [M, N] with f32 accumulation on the MXU."""
    M, K = x.shape
    K2, N = w.shape
    assert K == K2
    out_dtype = out_dtype or x.dtype

    # Clamp tiles to the (possibly tiny) problem; pad ragged dims.
    tm = M if M <= tm else tm
    tn = N if N <= tn else tn
    tk = K if K <= tk else tk

    xp = _pad_axis(_pad_axis(x, 0, tm), 1, tk)
    wp = _pad_axis(_pad_axis(w, 0, tk), 1, tn)
    Mp, Kp = xp.shape
    Np = wp.shape[1]

    out = pl.pallas_call(
        _matmul_kernel,
        out_shape=jax.ShapeDtypeStruct((Mp, Np), out_dtype),
        grid_spec=pltpu.PrefetchScalarGridSpec(
            num_scalar_prefetch=0,
            grid=(Mp // tm, Np // tn, Kp // tk),        # reduction axis last
            in_specs=[
                pl.BlockSpec((tm, tk), lambda i, j, k: (i, k)),
                pl.BlockSpec((tk, tn), lambda i, j, k: (k, j)),
            ],
            out_specs=pl.BlockSpec((tm, tn), lambda i, j, k: (i, j)),
            scratch_shapes=[pltpu.VMEM((tm, tn), jnp.float32)],
        ),
        compiler_params=pltpu.CompilerParams(
            dimension_semantics=("parallel", "parallel", "arbitrary")),
    )(xp, wp)

    if (Mp, Np) != (M, N):
        out = out[:M, :N]
    return out


# ---------------------------------------------------------------------------
# Fused (optional) per-head RMSNorm + RoPE.
# Reads q/k in projection layout (B, T, NH, 1, D) and writes head-major
# (B, NH, T, D): the layout change is absorbed by the out_specs DMA, so no
# separate XLA transpose pass is needed.  The 1/sqrt(D) attention scale is
# folded into cos/sin (output is linear in cos/sin) at zero in-kernel cost.
# ---------------------------------------------------------------------------
def _make_norm_rope_kernel(apply_norm, eps, half):
    def kernel(x_ref, cos_ref, sin_ref, g_ref, o_ref):
        x = x_ref[...].astype(jnp.float32)              # (tt, D), f32 math
        if apply_norm:                                  # RMSNorm over head_dim
            var = jnp.mean(x * x, axis=-1, keepdims=True)
            x = x * lax.rsqrt(var + eps) * g_ref[...]
        x1 = x[:, :half]
        x2 = x[:, half:]
        rotated = jnp.concatenate([-x2, x1], axis=-1)   # rotate_half
        o_ref[...] = (x * cos_ref[...] + rotated * sin_ref[...]).astype(o_ref.dtype)
    return kernel


def norm_rope(x5, cos, sin, gamma, *, apply_norm, scale=1.0, eps=1e-6, tt=256):
    """x5: [B, T, NH, 1, D]; cos/sin: [T, D]; gamma: [D] -> [B, NH, T, D]."""
    B, T, NH, _, D = x5.shape
    half = D // 2
    tt = T if T <= tt else tt

    x5 = _pad_axis(x5, 1, tt)
    Tp = x5.shape[1]
    cos_s = _pad_axis((cos * scale).astype(jnp.float32), 0, tt)
    sin_s = _pad_axis((sin * scale).astype(jnp.float32), 0, tt)
    g2d = gamma.reshape(1, D).astype(jnp.float32)

    out = pl.pallas_call(
        _make_norm_rope_kernel(apply_norm, eps, half),
        out_shape=jax.ShapeDtypeStruct((B, NH, Tp, D), x5.dtype),
        grid_spec=pltpu.PrefetchScalarGridSpec(
            num_scalar_prefetch=0,
            grid=(B, NH, Tp // tt),
            in_specs=[
                pl.BlockSpec((None, tt, None, None, D),
                             lambda b, h, ti: (b, ti, h, 0, 0)),
                pl.BlockSpec((tt, D), lambda b, h, ti: (ti, 0)),
                pl.BlockSpec((tt, D), lambda b, h, ti: (ti, 0)),
                pl.BlockSpec((1, D), lambda b, h, ti: (0, 0)),
            ],
            out_specs=pl.BlockSpec((None, None, tt, D),
                                   lambda b, h, ti: (b, h, ti, 0)),
        ),
        compiler_params=pltpu.CompilerParams(
            dimension_semantics=("parallel", "parallel", "parallel")),
    )(x5, cos_s, sin_s, g2d)

    if Tp != T:
        out = out[:, :, :T, :]
    return out


# ---------------------------------------------------------------------------
# GQA flash attention (causal): online softmax, in-kernel causal mask (no bias
# stream), causal block skipping, and one K/V tile per kv head shared by all
# group_size q-heads of its group.
# ---------------------------------------------------------------------------
def _flash_kernel(q_ref, k_ref, v_ref, o_ref, m_sc, l_sc, acc_sc):
    G, tq, _ = q_ref.shape
    tk = k_ref.shape[0]
    qi = pl.program_id(2)
    ki = pl.program_id(3)

    @pl.when(ki == 0)
    def _():
        m_sc[...] = jnp.full_like(m_sc, -jnp.inf)
        l_sc[...] = jnp.zeros_like(l_sc)
        acc_sc[...] = jnp.zeros_like(acc_sc)

    q_start = qi * tq
    k_start = ki * tk

    # Skip KV blocks that lie entirely above the causal diagonal.
    @pl.when(k_start < q_start + tq)
    def _():
        k = k_ref[...]                                   # (tk, D)
        v = v_ref[...]                                   # (tk, D)
        q_pos = q_start + lax.broadcasted_iota(jnp.int32, (tq, tk), 0)
        k_pos = k_start + lax.broadcasted_iota(jnp.int32, (tq, tk), 1)
        causal = q_pos >= k_pos                          # in-kernel mask

        for g in range(G):                               # static unroll over the group
            s = lax.dot_general(q_ref[g], k, (((1,), (1,)), ((), ())),
                                preferred_element_type=jnp.float32)
            s = jnp.where(causal, s, _MASK_VALUE)        # q already carries 1/sqrt(D)
            m_prev = m_sc[g]
            m_new = jnp.maximum(m_prev, jnp.max(s, axis=-1, keepdims=True))
            alpha = jnp.exp(m_prev - m_new)
            p = jnp.exp(s - m_new)
            l_sc[g] = alpha * l_sc[g] + jnp.sum(p, axis=-1, keepdims=True)
            acc_sc[g] = alpha * acc_sc[g] + jnp.dot(
                p.astype(v.dtype), v, preferred_element_type=jnp.float32)
            m_sc[g] = m_new

    @pl.when(ki == pl.num_programs(3) - 1)
    def _():
        for g in range(G):
            inv_l = pl.reciprocal(l_sc[g], approx=True)  # EUP, not a VALU divide
            o_ref[g] = (acc_sc[g] * inv_l).astype(o_ref.dtype)


def gqa_flash_attention(q, k, v5, *, tq=256, tk=256):
    """q: [B, H, T, D] (pre-scaled by 1/sqrt(D)); k: [B, KV, T, D];
    v5: [B, T, KV, 1, D] (projection layout, read in place). -> [B, H, T, D]."""
    B, H, T, D = q.shape
    KV = k.shape[1]
    G = H // KV

    tq = T if T <= tq else tq
    tk = T if T <= tk else tk
    q = _pad_axis(q, 2, tq)
    k = _pad_axis(k, 2, tk)
    v5 = _pad_axis(v5, 1, tk)
    Tq, Tk = q.shape[2], k.shape[2]

    out = pl.pallas_call(
        _flash_kernel,
        out_shape=jax.ShapeDtypeStruct((B, H, Tq, D), q.dtype),
        grid_spec=pltpu.PrefetchScalarGridSpec(
            num_scalar_prefetch=0,
            grid=(B, KV, Tq // tq, Tk // tk),            # kv-reduction axis last
            in_specs=[
                pl.BlockSpec((None, G, tq, D),
                             lambda b, g, qi, ki: (b, g, qi, 0)),
                pl.BlockSpec((None, None, tk, D),
                             lambda b, g, qi, ki: (b, g, ki, 0)),
                pl.BlockSpec((None, tk, None, None, D),
                             lambda b, g, qi, ki: (b, ki, g, 0, 0)),
            ],
            out_specs=pl.BlockSpec((None, G, tq, D),
                                   lambda b, g, qi, ki: (b, g, qi, 0)),
            scratch_shapes=[
                pltpu.VMEM((G, tq, 1), jnp.float32),     # running max
                pltpu.VMEM((G, tq, 1), jnp.float32),     # running denom
                pltpu.VMEM((G, tq, D), jnp.float32),     # output accumulator
            ],
        ),
        compiler_params=pltpu.CompilerParams(
            dimension_semantics=("parallel", "parallel", "parallel", "arbitrary")),
    )(q, k, v5)

    if Tq != T:
        out = out[:, :, :T, :]
    return out


# ---------------------------------------------------------------------------
# Full GroupedQueryAttention forward (use_cache=False)
# ---------------------------------------------------------------------------
def grouped_query_attention(x, mask, cos, sin, params, *, num_heads,
                            num_kv_groups, head_dim, qk_norm=True, eps=1e-6,
                            start_pos=0):
    """Forward of the Qwen3 GroupedQueryAttention module (use_cache=False).

    The attention kernel generates the causal mask in-kernel; the `mask`
    argument is kept for API parity with the PyTorch module.
    """
    del mask  # causal mask is generated inside the flash kernel
    B, T, d_in = x.shape
    H, KV, D = num_heads, num_kv_groups, head_dim
    M = B * T

    # Fused QKV projection; concatenated weight is prepared once outside.
    w_qkv = params.get("w_qkv")
    if w_qkv is None:
        w_qkv = jnp.concatenate([params["wq"], params["wk"], params["wv"]], axis=1)
    qkv = pallas_matmul(x.reshape(M, d_in), w_qkv)           # [M, (H+2*KV)*D]

    # Projection layouts (free reshapes, no transposes).
    q5 = qkv[:, : H * D].reshape(B, T, H, 1, D)
    k5 = qkv[:, H * D: (H + KV) * D].reshape(B, T, KV, 1, D)
    v5 = qkv[:, (H + KV) * D:].reshape(B, T, KV, 1, D)

    cos_t = cos[start_pos:start_pos + T]
    sin_t = sin[start_pos:start_pos + T]
    q_gamma = params.get("q_gamma", jnp.ones((D,), jnp.float32))
    k_gamma = params.get("k_gamma", jnp.ones((D,), jnp.float32))
    scale = 1.0 / math.sqrt(D)

    # Fused RMSNorm + RoPE; q also picks up the 1/sqrt(D) attention scale.
    q = norm_rope(q5, cos_t, sin_t, q_gamma, apply_norm=qk_norm,
                  scale=scale, eps=eps)                      # [B, H, T, D]
    k = norm_rope(k5, cos_t, sin_t, k_gamma, apply_norm=qk_norm,
                  scale=1.0, eps=eps)                        # [B, KV, T, D]

    ctx = gqa_flash_attention(q, k, v5)                      # [B, H, T, D]
    ctx = ctx.transpose(0, 2, 1, 3).reshape(M, H * D)

    out = pallas_matmul(ctx, params["wo"]).reshape(B, T, d_in)
    # TODO(synk): use_cache=True KV-cache path (concat + next_cache) not implemented.
    # TODO(synk): arbitrary (non-causal) user masks; the kernel assumes causal.
    return out, None


# ---------------------------------------------------------------------------
# Pure-JAX reference (mirrors the PyTorch module) and a small demo
# ---------------------------------------------------------------------------
def _rmsnorm_ref(x, gamma, eps):
    xf = x.astype(jnp.float32)
    var = jnp.mean(xf * xf, axis=-1, keepdims=True)
    return (xf * lax.rsqrt(var + eps) * gamma).astype(x.dtype)


def _rope_ref(x, cos, sin):
    half = x.shape[-1] // 2
    x1, x2 = x[..., :half], x[..., half:]
    rotated = jnp.concatenate([-x2, x1], axis=-1)
    return (x * cos[None, None] + rotated * sin[None, None]).astype(x.dtype)


def grouped_query_attention_ref(x, mask, cos, sin, params, *, num_heads,
                                num_kv_groups, head_dim, qk_norm=True, eps=1e-6):
    hp = lax.Precision.HIGHEST
    B, T, _ = x.shape
    H, KV, D = num_heads, num_kv_groups, head_dim
    q = jnp.einsum("btd,de->bte", x, params["wq"], precision=hp)
    k = jnp.einsum("btd,de->bte", x, params["wk"], precision=hp)
    v = jnp.einsum("btd,de->bte", x, params["wv"], precision=hp)
    q = q.reshape(B, T, H, D).transpose(0, 2, 1, 3)
    k = k.reshape(B, T, KV, D).transpose(0, 2, 1, 3)
    v = v.reshape(B, T, KV, D).transpose(0, 2, 1, 3)
    if qk_norm:
        q = _rmsnorm_ref(q, params["q_gamma"], eps)
        k = _rmsnorm_ref(k, params["k_gamma"], eps)
    q = _rope_ref(q, cos[:T], sin[:T])
    k = _rope_ref(k, cos[:T], sin[:T])
    gs = H // KV
    k = jnp.repeat(k, gs, axis=1)
    v = jnp.repeat(v, gs, axis=1)
    s = jnp.einsum("bhqd,bhkd->bhqk", q, k, precision=hp)
    s = jnp.where(mask[None, None], -jnp.inf, s)
    w = jax.nn.softmax(s / math.sqrt(D), axis=-1)
    ctx = jnp.einsum("bhqk,bhkd->bhqd", w, v, precision=hp)
    ctx = ctx.transpose(0, 2, 1, 3).reshape(B, T, H * D)
    return jnp.einsum("bte,ef->btf", ctx, params["wo"], precision=hp)


if __name__ == "__main__":
    B, T, d_in = 2, 8, 64
    num_heads, num_kv_groups, head_dim = 4, 2, 16
    context_len = 16
    dtype = jnp.float32

    key = jax.random.PRNGKey(0)
    k_x, k_wq, k_wk, k_wv, k_wo, k_g1, k_g2 = jax.random.split(key, 7)
    x = jax.random.normal(k_x, (B, T, d_in), dtype=dtype)
    params = {
        # Weights stored as (in_features, out_features) = nn.Linear.weight.T
        "wq": jax.random.normal(k_wq, (d_in, num_heads * head_dim), dtype=dtype) * 0.05,
        "wk": jax.random.normal(k_wk, (d_in, num_kv_groups * head_dim), dtype=dtype) * 0.05,
        "wv": jax.random.normal(k_wv, (d_in, num_kv_groups * head_dim), dtype=dtype) * 0.05,
        "wo": jax.random.normal(k_wo, (num_heads * head_dim, d_in), dtype=dtype) * 0.05,
        "q_gamma": 1.0 + 0.1 * jax.random.normal(k_g1, (head_dim,), dtype=jnp.float32),
        "k_gamma": 1.0 + 0.1 * jax.random.normal(k_g2, (head_dim,), dtype=jnp.float32),
    }
    # Fused QKV weight hoisted out of the forward (done once at setup time).
    params["w_qkv"] = jnp.concatenate([params["wq"], params["wk"], params["wv"]], axis=1)

    # RoPE tables (Qwen3 style: angle block duplicated across the two halves).
    half = head_dim // 2
    inv_freq = 1.0 / (10000.0 ** (jnp.arange(0, half, dtype=jnp.float32) / half))
    pos = jnp.arange(context_len, dtype=jnp.float32)
    angles = pos[:, None] * inv_freq[None, :]
    angles = jnp.concatenate([angles, angles], axis=-1)
    cos, sin = jnp.cos(angles), jnp.sin(angles)

    mask = jnp.triu(jnp.ones((T, T), dtype=bool), k=1)   # causal mask (for the ref)

    out, next_cache = grouped_query_attention(
        x, mask, cos, sin, params,
        num_heads=num_heads, num_kv_groups=num_kv_groups, head_dim=head_dim,
        qk_norm=True)
    out = jax.block_until_ready(out)

    ref = grouped_query_attention_ref(
        x, mask, cos, sin, params,
        num_heads=num_heads, num_kv_groups=num_kv_groups, head_dim=head_dim,
        qk_norm=True)

    assert out.shape == (B, T, d_in)
    assert next_cache is None
    err = float(jnp.max(jnp.abs(out - ref)))
    assert jnp.allclose(out, ref, atol=2e-3, rtol=2e-3), f"mismatch, max abs err {err}"

    print("KERNEL_OK")
</pallas_src>

<mosaic_0001>
module attributes {stable_mosaic.version = 11 : i64} {
  func.func @_matmul_kernel(%arg0: i32, %arg1: i32, %arg2: i32, %arg3: memref<16x64xf32, #tpu.memory_space<vmem>>, %arg4: memref<64x128xf32, #tpu.memory_space<vmem>>, %arg5: memref<16x128xf32, #tpu.memory_space<vmem>>, %arg6: memref<16x128xf32, #tpu.memory_space<vmem>>) attributes {dimension_semantics = [#tpu.dimension_semantics<parallel>, #tpu.dimension_semantics<parallel>, #tpu.dimension_semantics<arbitrary>], iteration_bounds = array<i64: 1, 1, 1>, scalar_prefetch = 0 : i64, scratch_operands = 1 : i64, tpu.core_type = #tpu.core_type<tc>, window_params = [{transform_indices = @transform_0, window_bounds = array<i64: 16, 64>}, {transform_indices = @transform_1, window_bounds = array<i64: 64, 128>}, {transform_indices = @transform_2, window_bounds = array<i64: 16, 128>}]} {
    %c0_i32 = arith.constant 0 : i32
    %0 = arith.cmpi eq, %arg2, %c0_i32 : i32
    %1 = arith.extui %0 : i1 to i32
    %c0_i32_0 = arith.constant 0 : i32
    %2 = arith.cmpi ne, %1, %c0_i32_0 : i32
    scf.if %2 {
      %cst_10 = arith.constant 0.000000e+00 : f32
      %12 = vector.broadcast %cst_10 : f32 to vector<16x128xf32>
      %c0_11 = arith.constant 0 : index
      %c0_12 = arith.constant 0 : index
      %13 = vector.load %arg6[%c0_11, %c0_12] : memref<16x128xf32, #tpu.memory_space<vmem>>, vector<16x128xf32>
      tpu.vector_store %arg6[%c0_11, %c0_12], %12 {strides = array<i32>} : memref<16x128xf32, #tpu.memory_space<vmem>>, vector<16x128xf32>,
    } else {
    }
    %c0 = arith.constant 0 : index
    %c0_1 = arith.constant 0 : index
    %3 = vector.load %arg6[%c0, %c0_1] : memref<16x128xf32, #tpu.memory_space<vmem>>, vector<16x128xf32>
    %c0_2 = arith.constant 0 : index
    %c0_3 = arith.constant 0 : index
    %4 = vector.load %arg3[%c0_2, %c0_3] : memref<16x64xf32, #tpu.memory_space<vmem>>, vector<16x64xf32>
    %c0_4 = arith.constant 0 : index
    %c0_5 = arith.constant 0 : index
    %5 = vector.load %arg4[%c0_4, %c0_5] : memref<64x128xf32, #tpu.memory_space<vmem>>, vector<64x128xf32>
    %cst = arith.constant dense<0.000000e+00> : vector<16x128xf32>
    %6 = tpu.matmul %4, %5, %cst {dimension_numbers = #tpu.dot_dimension_numbers<[1], [0], [0], [1], [0, 0, 1, 1], [], []>} : vector<16x64xf32>, vector<64x128xf32>, vector<16x128xf32> -> vector<16x128xf32>
    %7 = arith.addf %3, %6 : vector<16x128xf32>
    %c0_6 = arith.constant 0 : index
    %c0_7 = arith.constant 0 : index
    %8 = vector.load %arg6[%c0_6, %c0_7] : memref<16x128xf32, #tpu.memory_space<vmem>>, vector<16x128xf32>
    tpu.vector_store %arg6[%c0_6, %c0_7], %7 {strides = array<i32>} : memref<16x128xf32, #tpu.memory_space<vmem>>, vector<16x128xf32>,
    %c0_i32_8 = arith.constant 0 : i32
    %9 = arith.cmpi eq, %arg2, %c0_i32_8 : i32
    %10 = arith.extui %9 : i1 to i32
    %c0_i32_9 = arith.constant 0 : i32
    %11 = arith.cmpi ne, %10, %c0_i32_9 : i32
    scf.if %11 {
      %c0_10 = arith.constant 0 : index
      %c0_11 = arith.constant 0 : index
      %12 = vector.load %arg6[%c0_10, %c0_11] : memref<16x128xf32, #tpu.memory_space<vmem>>, vector<16x128xf32>
      %c0_12 = arith.constant 0 : index
      %c0_13 = arith.constant 0 : index
      %13 = vector.load %arg5[%c0_12, %c0_13] : memref<16x128xf32, #tpu.memory_space<vmem>>, vector<16x128xf32>
      tpu.vector_store %arg5[%c0_12, %c0_13], %12 {strides = array<i32>} : memref<16x128xf32, #tpu.memory_space<vmem>>, vector<16x128xf32>,
    } else {
    }
    return
  }
  func.func @transform_0(%arg0: i32, %arg1: i32, %arg2: i32) -> (i32, i32) {
    %c0_i32 = arith.constant 0 : i32
    return %arg0, %arg2 : i32, i32
  }
  func.func @transform_1(%arg0: i32, %arg1: i32, %arg2: i32) -> (i32, i32) {
    %c0_i32 = arith.constant 0 : i32
    return %arg2, %arg1 : i32, i32
  }
  func.func @transform_2(%arg0: i32, %arg1: i32, %arg2: i32) -> (i32, i32) {
    %c0_i32 = arith.constant 0 : i32
    return %arg0, %arg1 : i32, i32
  }
}

</mosaic_0001>

<llo_original>
// kernel: tpu_custom_call.1
$region0: #{tpu_custom_call.1}
  #allocation0 [shape = 'u32[]', space=smem, size = 0x4, offset = 0x4, fixed_abs, tag = 'smem constant byte address 0x4 - core index']
  #allocation1 [shape = 'u32[144,128]{1,0:T(1,128)}', space=vmem, size = 0x12000, scoped, tag = 'internal scratch']
  #allocation2 [shape = 'f32[16,128]{1,0:T(8,128)}', space=vmem, size = 0x2000, scoped, tag = 'scratch operand']
  %s0 = inlined_call_operand.hbm [shape: f32[16,64], index: 0, kind: input, shape index: {}]
  %s1 = inlined_call_operand.hbm [shape: f32[64,128], index: 1, kind: input, shape index: {}]
  %s2 = inlined_call_operand.hbm [shape: f32[16,128], index: 2, kind: output, shape index: {}]
  %s3 = sld [smem:[#allocation0]]
  $region34: #{tpu_custom_call.1} parent=0
    _
  %s5 = ssub.s32 1, %s3
  %s6 = scalar_select 0, %s5, %s3
  $region1: #{tpu_custom_call.1} parent=0
    #allocation3 [shape = 'u8[8192]{0}', space=vmem, size = 0x2000, scoped, tag = 'input window, operand 0, single buffered']
    #allocation4 [shape = 's32[1]{0}', space=sflag, size = 0x4, scoped, tag = 'scoped memory for tpu_custom_call.1']
    #allocation5 [shape = 's32[1]{0}', space=sflag, size = 0x4, scoped, tag = 'scoped memory for tpu_custom_call.1']
    #allocation6 [shape = 'u8[32768]{0}', space=vmem, size = 0x8000, scoped, tag = 'input window, operand 1, single buffered']
    #allocation7 [shape = 's32[1]{0}', space=sflag, size = 0x4, scoped, tag = 'scoped memory for tpu_custom_call.1']
    #allocation8 [shape = 'u8[8192]{0}', space=vmem, size = 0x2000, scoped, tag = 'output window, operand 0, single buffered']
    %7 = vsyncpa [#allocation4], 0
    %8 = vsyncpa [#allocation7], 0
    %9 = vsyncpa [#allocation5], 0
    // Predicated region
    $region2: #{tpu_custom_call.1} parent=1 // pred_check
      _
    $region3: #{tpu_custom_call.1} parent=1 // pred_check_branch
      %11 = sbr.rel (0) target = $region5
    $region4: #{tpu_custom_call.1} parent=1 // pred_region
      %s13 = ssub.s32 256, 256
      %14 = vsyncadd [#allocation4], %s13
      %s15 = sshll.u32 [#allocation3], 4
      %s16 = int_to_ptr.vmem [resolvable:$true] %s15
      %21 = dma.hbm_to_vmem [thread:$0]  %s0, 256, %s16, [#allocation4], 128, 128, 8
    $region5: #{tpu_custom_call.1} parent=1 // pred_fallthru
      _
    // Predicated region
    $region6: #{tpu_custom_call.1} parent=1 // pred_check
      _
    $region7: #{tpu_custom_call.1} parent=1 // pred_check_branch
      %23 = sbr.rel (0) target = $region9
    $region8: #{tpu_custom_call.1} parent=1 // pred_region
      %s25 = ssub.s32 1024, 1024
      %26 = vsyncadd [#allocation7], %s25
      %s27 = sshll.u32 [#allocation6], 4
      %s28 = int_to_ptr.vmem [resolvable:$true] %s27
      %33 = dma.hbm_to_vmem [thread:$0]  %s1, 1024, %s28, [#allocation7], 128, 128, 8
    $region9: #{tpu_custom_call.1} parent=1 // pred_fallthru
      _
    // Predicated region
    $region10: #{tpu_custom_call.1} parent=1 // pred_check
      _
    $region11: #{tpu_custom_call.1} parent=1 // pred_check_branch
      %35 = sbr.rel (0) target = $region13
    $region12: #{tpu_custom_call.1} parent=1 // pred_region
      %36 = dma.done [#allocation4], 256
    $region13: #{tpu_custom_call.1} parent=1 // pred_fallthru
      _
    // Predicated region
    $region14: #{tpu_custom_call.1} parent=1 // pred_check
      _
    $region15: #{tpu_custom_call.1} parent=1 // pred_check_branch
      %38 = sbr.rel (0) target = $region17
    $region16: #{tpu_custom_call.1} parent=1 // pred_region
      %39 = dma.done [#allocation7], 1024
    $region17: #{tpu_custom_call.1} parent=1 // pred_fallthru
      _
    %p40 = scmp.eq.s32.totalorder 0, 0
    // Predicated region
    $region18: #{tpu_custom_call.1} parent=1 // pred_check
      %p41 = pneg %p40
    $region19: #{tpu_custom_call.1} parent=1 // pred_check_branch
      %43 = sbr.rel (%p41) target = $region21
    $region20: #{tpu_custom_call.1} parent=1 // pred_region
      %44 = vst [vmem:[#allocation2] sm:$0xff] 0.0
      %45 = vst [vmem:[#allocation2 + $0x8] sm:$0xff] 0.0
    $region21: #{tpu_custom_call.1} parent=1 // pred_fallthru
      _
    %v46 = vld [vmem:[#allocation2] sm:$0xff]
    %v47 = vld [vmem:[#allocation2 + $0x8] sm:$0xff]
    %v48 = vld [vmem:[#allocation3] sm:$0xff]
    %v49 = vld [vmem:[#allocation3 + $0x8] sm:$0xff]
    %v50 = vld [vmem:[#allocation6] sm:$0xff]
    %v51 = vld [vmem:[#allocation6 + $0x8] sm:$0xff]
    %v52 = vld [vmem:[#allocation6 + $0x10] sm:$0xff]
    %v53 = vld [vmem:[#allocation6 + $0x18] sm:$0xff]
    %v54 = vld [vmem:[#allocation6 + $0x20] sm:$0xff]
    %v55 = vld [vmem:[#allocation6 + $0x28] sm:$0xff]
    %v56 = vld [vmem:[#allocation6 + $0x30] sm:$0xff]
    %v57 = vld [vmem:[#allocation6 + $0x38] sm:$0xff]
    %vm58 = vcmask 523264
    %v60 = vsel %vm58, %v48, 0
    %v63 = vsel %vm58, %v49, 0
    %65 = vmatprep.subr.mxu0 0.0
    %66 = vmatpush1.msra.mxu0 %v50
    %67 = vmatprep.subr.mxu0 0.0
    %68 = vmatpush1.msra.mxu0 %v51
    %69 = vmatprep.subr.mxu0 0.0
    %70 = vmatpush1.msra.mxu0 %v52
    %71 = vmatprep.subr.mxu0 0.0
    %72 = vmatpush1.msra.mxu0 %v53
    %73 = vmatprep.subr.mxu0 0.0
    %74 = vmatpush1.msra.mxu0 %v54
    %75 = vmatprep.subr.mxu0 0.0
    %76 = vmatpush1.msra.mxu0 %v55
    %77 = vmatprep.subr.mxu0 0.0
    %78 = vmatpush1.msra.mxu0 %v56
    %79 = vmatprep.subr.mxu0 0.0
    %80 = vmatpush1.msra.mxu0 %v57
    %81 = vmatprep.subr.mxu0 0.0
    %82 = vmatpush1.msra.mxu0 0.0
    %83 = vmatprep.subr.mxu0 0.0
    %84 = vmatpush1.msra.mxu0 0.0
    %85 = vmatprep.subr.mxu0 0.0
    %86 = vmatpush1.msra.mxu0 0.0
    %87 = vmatprep.subr.mxu0 0.0
    %88 = vmatpush1.msra.mxu0 0.0
    %89 = vmatprep.subr.mxu0 0.0
    %90 = vmatpush1.msra.mxu0 0.0
    %91 = vmatprep.subr.mxu0 0.0
    %92 = vmatpush1.msra.mxu0 0.0
    %93 = vmatprep.subr.mxu0 0.0
    %94 = vmatpush1.msra.mxu0 0.0
    %95 = vmatprep.subr.mxu0 0.0
    %96 = vmatpush1.msra.mxu0 0.0
    %97 = vmatprep.subr.mxu0 0.0
    %98 = vmatpush1.msra.mxu0 0.0
    %99 = vmatprep.subr.mxu0 0.0
    %100 = vmatpush1.msra.mxu0 0.0
    %101 = vmatprep.subr.mxu0 0.0
    %102 = vmatpush1.msra.mxu0 0.0
    %103 = vmatprep.subr.mxu0 0.0
    %104 = vmatpush1.msra.mxu0 0.0
    %105 = vmatprep.subr.mxu0 0.0
    %106 = vmatpush1.msra.mxu0 0.0
    %107 = vmatprep.subr.mxu0 0.0
    %108 = vmatpush1.msra.mxu0 0.0
    %109 = vmatprep.subr.mxu0 0.0
    %110 = vmatpush1.msra.mxu0 0.0
    %111 = vmatprep.subr.mxu0 0.0
    %112 = vmatpush1.msra.mxu0 0.0
    %113 = vmatprep.subr.mxu0 0.0
    %114 = vmatpush1.msra.mxu0 0.0
    %115 = vmatprep.subr.mxu0 0.0
    %116 = vmatpush1.msra.mxu0 0.0
    %117 = vmatprep.subr.mxu0 0.0
    %118 = vmatpush1.msra.mxu0 0.0
    %119 = vmatprep.subr.mxu0 0.0
    %120 = vmatpush1.msra.mxu0 0.0
    %121 = vmatprep.subr.mxu0 0.0
    %122 = vmatpush1.msra.mxu0 0.0
    %123 = vmatprep.subr.mxu0 0.0
    %124 = vmatpush1.msra.mxu0 0.0
    %125 = vmatprep.subr.mxu0 0.0
    %126 = vmatpush1.msra.mxu0 0.0
    %127 = vmatprep.subr.mxu0 0.0
    %128 = vmatpush1.msra.mxu0 0.0
    %129 = vmatprep.mubr.f32.mxu0 0.0
    %130 = vmatmul.mubr.f32.gmra.mrb[0].mxu0 %v60
    %v131 = vpop.f32.mrb[0].mxu0
    %v132 = vadd.f32 0.0, %v131
    %v133 = vpop.f32.mrb[0].mxu0
    %134 = vmatprep.mubr.f32.mxu0 0.0
    %135 = vmatmul.mubr.f32.gmra.mrb[0].mxu0 %v63
    %v136 = vpop.f32.mrb[0].mxu0
    %v137 = vadd.f32 0.0, %v136
    %v138 = vpop.f32.mrb[0].mxu0
    %139 = vdwg.mxu0
    %v140 = vadd.f32 %v46, %v132
    %v141 = vadd.f32 %v47, %v137
    %142 = vst [vmem:[#allocation2] sm:$0xff] %v140
    %143 = vst [vmem:[#allocation2 + $0x8] sm:$0xff] %v141
    // Predicated region
    $region22: #{tpu_custom_call.1} parent=1 // pred_check
      %p144 = pneg %p40
    $region23: #{tpu_custom_call.1} parent=1 // pred_check_branch
      %146 = sbr.rel (%p144) target = $region25
    $region24: #{tpu_custom_call.1} parent=1 // pred_region
      %v147 = vld [vmem:[#allocation2] sm:$0xff]
      %v148 = vld [vmem:[#allocation2 + $0x8] sm:$0xff]
      %149 = vst [vmem:[#allocation8] sm:$0xff] %v147
      %150 = vst [vmem:[#allocation8 + $0x8] sm:$0xff] %v148
    $region25: #{tpu_custom_call.1} parent=1 // pred_fallthru
      _
    // Predicated region
    $region26: #{tpu_custom_call.1} parent=1 // pred_check
      _
    $region27: #{tpu_custom_call.1} parent=1 // pred_check_branch
      %152 = sbr.rel (0) target = $region29
    $region28: #{tpu_custom_call.1} parent=1 // pred_region
      %s154 = ssub.s32 256, 256
      %155 = vsyncadd [#allocation5], %s154
      %s156 = sshll.u32 [#allocation8], 4
      %s157 = int_to_ptr.vmem [resolvable:$true] %s156
      %162 = dma.vmem_to_hbm [thread:$0]  %s157, 256, %s2, [#allocation5], 128, 128, 8
    $region29: #{tpu_custom_call.1} parent=1 // pred_fallthru
      _
    // Predicated region
    $region30: #{tpu_custom_call.1} parent=1 // pred_check
      _
    $region31: #{tpu_custom_call.1} parent=1 // pred_check_branch
      %164 = sbr.rel (0) target = $region33
    $region32: #{tpu_custom_call.1} parent=1 // pred_region
      %165 = dma.done [#allocation5], 256
    $region33: #{tpu_custom_call.1} parent=1 // pred_fallthru
      _
    %166 = vsyncpa [#allocation4], 1
    %167 = vsyncpa [#allocation7], 1
    %168 = vsyncpa [#allocation5], 1

</llo_original>
